<compile_context>
chip_gen: v6e
topology: v6e:2x2x1
jax: 0.10.0
libtpu: 0.0.40
codegen_flags: <defaults>
</compile_context>

<pallas_src>
import numpy as np
import jax
import jax.numpy as jnp
from jax.experimental import pallas as pl
from jax.experimental.pallas import tpu as pltpu

_LOG_CLAMP = -100.0   # PyTorch BCELoss clamps each log term at -100.
_LANES = 128
_SUBLANES = 8


def _round_up(x, m):
    return -(-x // m) * m


# ---------------------------------------------------------------------------
# Kernel factory: all layout metadata is static and closed over at trace time.
# ---------------------------------------------------------------------------
def _make_loss5_kernel(pair_rows, pair_counts, group_meta):
    """pair_rows[p]   = (row_start, row_end) of pair p inside the BCE slab.
       pair_counts[p] = true element count of pair p (BCE mean divisor).
       group_meta[g]  = {'h', 'w', 'members': ((pair, lane_s, lane_e, n), ...)}
                        describing one shared edge slab."""
    n_groups = len(group_meta)

    def kernel(*refs):
        xs_ref, ys_ref = refs[0], refs[1]
        ex_refs = refs[2:2 + n_groups]
        ey_refs = refs[2 + n_groups:2 + 2 * n_groups]
        o_ref = refs[2 + 2 * n_groups]

        # ---- BCE for all five pairs on the lane-dense (rows, 128) slabs ----
        xs = xs_ref[...]
        ys = ys_ref[...]
        log_x = jnp.maximum(jnp.log(xs), _LOG_CLAMP)
        log_1mx = jnp.maximum(jnp.log(1.0 - xs), _LOG_CLAMP)
        bce_map = -(ys * log_x + (1.0 - ys) * log_1mx)
        # One cross-lane reduce for the whole slab, then tiny masked sums of
        # the (rows, 1) column per pair (each pair owns whole rows).
        row_sums = jnp.sum(bce_map, axis=1, keepdims=True)
        ridx = jax.lax.broadcasted_iota(jnp.int32, row_sums.shape, 0)
        bce_mean = []
        for (rs, re), cnt in zip(pair_rows, pair_counts):
            s = jnp.sum(jnp.where((ridx >= rs) & (ridx < re), row_sums, 0.0))
            bce_mean.append(s * (1.0 / cnt))

        # ---- edge / SmoothL1 terms for the three fuse pairs ----------------
        edge_mean = {}
        for gi in range(n_groups):
            h = group_meta[gi]["h"]
            w = group_meta[gi]["w"]
            xg = ex_refs[gi][...]
            yg = ey_refs[gi][...]
            hp, nwp = xg.shape              # padded to (mult of 8, mult of 128)

            def grad_mag(a):
                # Centered 3x3 stencil via circular rolls (XLU slot); the
                # wrap-around / cross-image positions are masked out below.
                gx = pltpu.roll(a, 1, 1) - pltpu.roll(a, nwp - 1, 1)  # a[r,c-1]-a[r,c+1]
                gy = pltpu.roll(a, 1, 0) - pltpu.roll(a, hp - 1, 0)   # a[r-1,c]-a[r+1,c]
                return jnp.sqrt(gx * gx + gy * gy)

            d = grad_mag(xg) - grad_mag(yg)
            ad = jnp.abs(d)
            sl1 = jnp.where(ad < 1.0, 0.5 * d * d, ad - 0.5)

            # Valid stencil rows -> one sublane reduce per slab.
            r = jax.lax.broadcasted_iota(jnp.int32, sl1.shape, 0)
            row_ok = (r >= 1) & (r <= h - 2)
            col_sums = jnp.sum(jnp.where(row_ok, sl1, 0.0), axis=0,
                               keepdims=True)                       # (1, NWp)

            c = jax.lax.broadcasted_iota(jnp.int32, col_sums.shape, 1)
            if w & (w - 1) == 0:
                cw = c & (w - 1)            # power-of-two width: bitwise and
            else:
                cw = c % w
            col_ok = (cw >= 1) & (cw <= w - 2)
            for (pair, lane_s, lane_e, n_img) in group_meta[gi]["members"]:
                m = col_ok & (c >= lane_s) & (c < lane_e)
                s = jnp.sum(jnp.where(m, col_sums, 0.0))
                edge_mean[pair] = s * (1.0 / (n_img * (h - 2) * (w - 2)))

        # ---- combine --------------------------------------------------------
        # record[0] includes the 2x weight, matching the reference module.
        main = (bce_mean[0] + edge_mean[0]) * 2.0
        au1 = bce_mean[1] + edge_mean[1]
        au2 = bce_mean[2] + edge_mean[2]
        au3 = bce_mean[3]
        au4 = bce_mean[4]
        total = main + au1 + au2 + au3 + au4

        # Single unmasked (1, 128) vector store; lanes 0..5 hold the results.
        lane = jax.lax.broadcasted_iota(jnp.int32, o_ref.shape, 1)
        row = jnp.zeros(o_ref.shape, jnp.float32)
        for i, v in enumerate((total, main, au1, au2, au3, au4)):
            row = jnp.where(lane == i, v, row)
        o_ref[...] = row

    return kernel


# ---------------------------------------------------------------------------
# Wrapper: layout plumbing + the single pallas_call
# ---------------------------------------------------------------------------
def loss5_forward(out, gt):
    """Forward pass of loss5: returns (total_loss, [main, au1, au2, au3, au4])."""
    assert len(out) == 5 and len(gt) == 5

    # (1) Lane-dense BCE slabs: all five pairs flattened, each padded to whole
    #     128-lane rows (pad value 1.0 contributes exactly zero BCE).
    x_rows, y_rows, pair_rows, pair_counts = [], [], [], []
    row = 0
    for xp, yp in zip(out, gt):
        assert xp.shape == yp.shape
        cnt = int(np.prod(xp.shape))
        nrows = _round_up(cnt, _LANES) // _LANES
        pad = nrows * _LANES - cnt
        xf = jnp.pad(jnp.reshape(xp, (-1,)).astype(jnp.float32), (0, pad),
                     constant_values=1.0)
        yf = jnp.pad(jnp.reshape(yp, (-1,)).astype(jnp.float32), (0, pad),
                     constant_values=1.0)
        x_rows.append(xf.reshape(nrows, _LANES))
        y_rows.append(yf.reshape(nrows, _LANES))
        pair_rows.append((row, row + nrows))
        pair_counts.append(cnt)
        row += nrows
    xs = jnp.concatenate(x_rows, axis=0)
    ys = jnp.concatenate(y_rows, axis=0)

    # (2) Edge views for the three fuse pairs: (H, N*W) with batch packed
    #     along lanes; equal-(H, W) pairs share one slab; padded up to whole
    #     (8, 128) tiles so the roll-based stencil stays tile-aligned.
    groups = {}
    for p in range(3):
        n, ch, h, w = out[p].shape
        assert ch == 1, "edge_loss conv filters expect a single channel"
        xe = jnp.transpose(jnp.reshape(out[p], (n, h, w)).astype(jnp.float32),
                           (1, 0, 2)).reshape(h, n * w)
        ye = jnp.transpose(jnp.reshape(gt[p], (n, h, w)).astype(jnp.float32),
                           (1, 0, 2)).reshape(h, n * w)
        g = groups.setdefault((h, w), {"x": [], "y": [], "members": [], "lanes": 0})
        g["members"].append((p, g["lanes"], g["lanes"] + n * w, n))
        g["x"].append(xe)
        g["y"].append(ye)
        g["lanes"] += n * w

    ex_args, ey_args, group_meta = [], [], []
    for (h, w), g in groups.items():
        xg = jnp.concatenate(g["x"], axis=1)
        yg = jnp.concatenate(g["y"], axis=1)
        rpad = _round_up(h, _SUBLANES) - h
        cpad = _round_up(xg.shape[1], _LANES) - xg.shape[1]
        if rpad or cpad:
            xg = jnp.pad(xg, ((0, rpad), (0, cpad)), constant_values=1.0)
            yg = jnp.pad(yg, ((0, rpad), (0, cpad)), constant_values=1.0)
        ex_args.append(xg)
        ey_args.append(yg)
        group_meta.append({"h": h, "w": w, "members": tuple(g["members"])})

    kernel = _make_loss5_kernel(tuple(pair_rows), tuple(pair_counts), group_meta)

    args = (xs, ys, *ex_args, *ey_args)
    in_specs = [pl.BlockSpec(a.shape, lambda: (0, 0)) for a in args]

    total_elems = int(sum(pair_counts))
    interior = int(sum(n_img * (m["h"] - 2) * (m["w"] - 2)
                       for m in group_meta
                       for (_, _, _, n_img) in m["members"]))
    in_bytes = 4 * int(sum(int(a.size) for a in args))
    cost = pl.CostEstimate(
        flops=12 * total_elems + 24 * interior,
        transcendentals=2 * total_elems + 2 * interior,   # 2 logs/elem + sqrts
        bytes_accessed=in_bytes + 4 * _LANES,
    )

    row_out = pl.pallas_call(
        kernel,
        out_shape=jax.ShapeDtypeStruct((1, _LANES), jnp.float32),
        in_specs=in_specs,
        out_specs=pl.BlockSpec((1, _LANES), lambda: (0, 0)),
        cost_estimate=cost,
    )(*args)

    total_loss = row_out[0, 0]
    record = [row_out[0, 1], row_out[0, 2], row_out[0, 3], row_out[0, 4],
              row_out[0, 5]]
    return total_loss, record


# ---------------------------------------------------------------------------
# Pure-JAX reference (autodiff-friendly path; also used as a correctness check)
# ---------------------------------------------------------------------------
def _ref_bce_mean(x, y):
    x = x.astype(jnp.float32)
    y = y.astype(jnp.float32)
    lx = jnp.maximum(jnp.log(x), _LOG_CLAMP)
    l1x = jnp.maximum(jnp.log(1.0 - x), _LOG_CLAMP)
    return jnp.mean(-(y * lx + (1.0 - y) * l1x))


def _ref_grad_mag(a):            # a: (N, H, W)
    gx = a[:, 1:-1, :-2] - a[:, 1:-1, 2:]
    gy = a[:, :-2, 1:-1] - a[:, 2:, 1:-1]
    return jnp.sqrt(gx * gx + gy * gy)


def _ref_fuse(x, y):             # x, y: (N, 1, H, W)
    n, _, h, w = x.shape
    bce = _ref_bce_mean(x, y)
    gx = _ref_grad_mag(jnp.reshape(x, (n, h, w)).astype(jnp.float32))
    gy = _ref_grad_mag(jnp.reshape(y, (n, h, w)).astype(jnp.float32))
    d = gx - gy
    ad = jnp.abs(d)
    sl1 = jnp.where(ad < 1.0, 0.5 * d * d, ad - 0.5)
    return bce + jnp.mean(sl1)


def loss5_reference(out, gt):
    main = _ref_fuse(out[0], gt[0]) * 2.0
    au1 = _ref_fuse(out[1], gt[1])
    au2 = _ref_fuse(out[2], gt[2])
    au3 = _ref_bce_mean(out[3], gt[3])
    au4 = _ref_bce_mean(out[4], gt[4])
    total = main + au1 + au2 + au3 + au4
    return total, [main, au1, au2, au3, au4]


# ---------------------------------------------------------------------------
# Demo
# ---------------------------------------------------------------------------
if __name__ == "__main__":
    key = jax.random.PRNGKey(0)

    # 5 prediction / target pairs; C == 1 for the pairs that go through
    # edge_loss (the fixed 3x3 filters are single-channel).
    shapes = [
        (2, 1, 16, 16),  # main (fuse_loss)
        (2, 1, 16, 16),  # aux1 (fuse_loss)
        (2, 1, 8, 8),    # aux2 (fuse_loss)
        (2, 1, 16, 16),  # aux3 (BCE only)
        (2, 1, 8, 8),    # aux4 (BCE only)
    ]

    out_list, gt_list = [], []
    for s in shapes:
        key, k1, k2 = jax.random.split(key, 3)
        # BCELoss needs probabilities strictly inside (0, 1).
        out_list.append(jax.random.uniform(k1, s, jnp.float32, 0.02, 0.98))
        gt_list.append(jax.random.uniform(k2, s, jnp.float32, 0.02, 0.98))

    total, record = loss5_forward(out_list, gt_list)
    total = float(jax.block_until_ready(total))
    record = [float(jax.block_until_ready(r)) for r in record]  # .item() equiv

    ref_total, ref_record = loss5_reference(out_list, gt_list)
    ref_total = float(jax.block_until_ready(ref_total))
    ref_record = [float(r) for r in ref_record]

    np.testing.assert_allclose(total, ref_total, rtol=1e-4, atol=1e-5)
    np.testing.assert_allclose(record, ref_record, rtol=1e-4, atol=1e-5)
    assert abs(total - sum(record)) < 1e-4
    print("KERNEL_OK")
</pallas_src>

<mosaic_0001>
module attributes {stable_mosaic.version = 11 : i64} {
  func.func @kernel(%arg0: memref<14x128xf32, #tpu.memory_space<vmem>>, %arg1: memref<14x128xf32, #tpu.memory_space<vmem>>, %arg2: memref<16x128xf32, #tpu.memory_space<vmem>>, %arg3: memref<8x128xf32, #tpu.memory_space<vmem>>, %arg4: memref<16x128xf32, #tpu.memory_space<vmem>>, %arg5: memref<8x128xf32, #tpu.memory_space<vmem>>, %arg6: memref<1x128xf32, #tpu.memory_space<vmem>>) attributes {dimension_semantics = [], scalar_prefetch = 0 : i64, scratch_operands = 0 : i64, tpu.core_type = #tpu.core_type<tc>} {
    %c0 = arith.constant 0 : index
    %c0_0 = arith.constant 0 : index
    %0 = vector.load %arg0[%c0, %c0_0] : memref<14x128xf32, #tpu.memory_space<vmem>>, vector<14x128xf32>
    %c0_1 = arith.constant 0 : index
    %c0_2 = arith.constant 0 : index
    %1 = vector.load %arg1[%c0_1, %c0_2] : memref<14x128xf32, #tpu.memory_space<vmem>>, vector<14x128xf32>
    %2 = math.log %0 : vector<14x128xf32>
    %cst = arith.constant -1.000000e+02 : f32
    %3 = vector.broadcast %cst : f32 to vector<14x128xf32>
    %4 = arith.maximumf %2, %3 : vector<14x128xf32>
    %cst_3 = arith.constant 1.000000e+00 : f32
    %5 = vector.broadcast %cst_3 : f32 to vector<14x128xf32>
    %6 = arith.subf %5, %0 : vector<14x128xf32>
    %7 = math.log %6 : vector<14x128xf32>
    %cst_4 = arith.constant -1.000000e+02 : f32
    %8 = vector.broadcast %cst_4 : f32 to vector<14x128xf32>
    %9 = arith.maximumf %7, %8 : vector<14x128xf32>
    %10 = arith.mulf %1, %4 : vector<14x128xf32>
    %cst_5 = arith.constant 1.000000e+00 : f32
    %11 = vector.broadcast %cst_5 : f32 to vector<14x128xf32>
    %12 = arith.subf %11, %1 : vector<14x128xf32>
    %13 = arith.mulf %12, %9 : vector<14x128xf32>
    %14 = arith.addf %10, %13 : vector<14x128xf32>
    %cst_6 = arith.constant 0.000000e+00 : f32
    %15 = vector.broadcast %cst_6 : f32 to vector<14x128xf32>
    %16 = arith.subf %15, %14 : vector<14x128xf32>
    %cst_7 = arith.constant dense<0.000000e+00> : vector<14xf32>
    %17 = vector.multi_reduction <add>, %16, %cst_7 [1] : vector<14x128xf32> to vector<14xf32>
    %18 = vector.shape_cast %17 : vector<14xf32> to vector<14x1xf32>
    %19 = tpu.iota {dimensions = array<i32: 0>} : vector<14x1xi32>
    %c0_i32 = arith.constant 0 : i32
    %20 = vector.broadcast %c0_i32 : i32 to vector<14x1xi32>
    %21 = arith.cmpi sge, %19, %20 : vector<14x1xi32>
    %c4_i32 = arith.constant 4 : i32
    %22 = vector.broadcast %c4_i32 : i32 to vector<14x1xi32>
    %23 = arith.cmpi slt, %19, %22 : vector<14x1xi32>
    %24 = arith.andi %21, %23 : vector<14x1xi1>
    %cst_8 = arith.constant 0.000000e+00 : f32
    %25 = vector.broadcast %cst_8 : f32 to vector<14x1xf32>
    %26 = arith.select %24, %18, %25 : vector<14x1xi1>, vector<14x1xf32>
    %27 = vector.shape_cast %26 : vector<14x1xf32> to vector<1x14x1xf32>
    %cst_9 = arith.constant dense<0.000000e+00> : vector<1xf32>
    %28 = vector.multi_reduction <add>, %27, %cst_9 [1, 2] : vector<1x14x1xf32> to vector<1xf32>
    %29 = vector.shape_cast %28 : vector<1xf32> to vector<1x1x1xf32>
    %30 = vector.extract %29[0, 0, 0] : f32 from vector<1x1x1xf32>
    %cst_10 = arith.constant 0.001953125 : f32
    %31 = arith.mulf %30, %cst_10 : f32
    %c4_i32_11 = arith.constant 4 : i32
    %32 = vector.broadcast %c4_i32_11 : i32 to vector<14x1xi32>
    %33 = arith.cmpi sge, %19, %32 : vector<14x1xi32>
    %c8_i32 = arith.constant 8 : i32
    %34 = vector.broadcast %c8_i32 : i32 to vector<14x1xi32>
    %35 = arith.cmpi slt, %19, %34 : vector<14x1xi32>
    %36 = arith.andi %33, %35 : vector<14x1xi1>
    %cst_12 = arith.constant 0.000000e+00 : f32
    %37 = vector.broadcast %cst_12 : f32 to vector<14x1xf32>
    %38 = arith.select %36, %18, %37 : vector<14x1xi1>, vector<14x1xf32>
    %39 = vector.shape_cast %38 : vector<14x1xf32> to vector<1x14x1xf32>
    %cst_13 = arith.constant dense<0.000000e+00> : vector<1xf32>
    %40 = vector.multi_reduction <add>, %39, %cst_13 [1, 2] : vector<1x14x1xf32> to vector<1xf32>
    %41 = vector.shape_cast %40 : vector<1xf32> to vector<1x1x1xf32>
    %42 = vector.extract %41[0, 0, 0] : f32 from vector<1x1x1xf32>
    %cst_14 = arith.constant 0.001953125 : f32
    %43 = arith.mulf %42, %cst_14 : f32
    %c8_i32_15 = arith.constant 8 : i32
    %44 = vector.broadcast %c8_i32_15 : i32 to vector<14x1xi32>
    %45 = arith.cmpi sge, %19, %44 : vector<14x1xi32>
    %c9_i32 = arith.constant 9 : i32
    %46 = vector.broadcast %c9_i32 : i32 to vector<14x1xi32>
    %47 = arith.cmpi slt, %19, %46 : vector<14x1xi32>
    %48 = arith.andi %45, %47 : vector<14x1xi1>
    %cst_16 = arith.constant 0.000000e+00 : f32
    %49 = vector.broadcast %cst_16 : f32 to vector<14x1xf32>
    %50 = arith.select %48, %18, %49 : vector<14x1xi1>, vector<14x1xf32>
    %51 = vector.shape_cast %50 : vector<14x1xf32> to vector<1x14x1xf32>
    %cst_17 = arith.constant dense<0.000000e+00> : vector<1xf32>
    %52 = vector.multi_reduction <add>, %51, %cst_17 [1, 2] : vector<1x14x1xf32> to vector<1xf32>
    %53 = vector.shape_cast %52 : vector<1xf32> to vector<1x1x1xf32>
    %54 = vector.extract %53[0, 0, 0] : f32 from vector<1x1x1xf32>
    %cst_18 = arith.constant 7.812500e-03 : f32
    %55 = arith.mulf %54, %cst_18 : f32
    %c9_i32_19 = arith.constant 9 : i32
    %56 = vector.broadcast %c9_i32_19 : i32 to vector<14x1xi32>
    %57 = arith.cmpi sge, %19, %56 : vector<14x1xi32>
    %c13_i32 = arith.constant 13 : i32
    %58 = vector.broadcast %c13_i32 : i32 to vector<14x1xi32>
    %59 = arith.cmpi slt, %19, %58 : vector<14x1xi32>
    %60 = arith.andi %57, %59 : vector<14x1xi1>
    %cst_20 = arith.constant 0.000000e+00 : f32
    %61 = vector.broadcast %cst_20 : f32 to vector<14x1xf32>
    %62 = arith.select %60, %18, %61 : vector<14x1xi1>, vector<14x1xf32>
    %63 = vector.shape_cast %62 : vector<14x1xf32> to vector<1x14x1xf32>
    %cst_21 = arith.constant dense<0.000000e+00> : vector<1xf32>
    %64 = vector.multi_reduction <add>, %63, %cst_21 [1, 2] : vector<1x14x1xf32> to vector<1xf32>
    %65 = vector.shape_cast %64 : vector<1xf32> to vector<1x1x1xf32>
    %66 = vector.extract %65[0, 0, 0] : f32 from vector<1x1x1xf32>
    %cst_22 = arith.constant 0.001953125 : f32
    %67 = arith.mulf %66, %cst_22 : f32
    %c13_i32_23 = arith.constant 13 : i32
    %68 = vector.broadcast %c13_i32_23 : i32 to vector<14x1xi32>
    %69 = arith.cmpi sge, %19, %68 : vector<14x1xi32>
    %c14_i32 = arith.constant 14 : i32
    %70 = vector.broadcast %c14_i32 : i32 to vector<14x1xi32>
    %71 = arith.cmpi slt, %19, %70 : vector<14x1xi32>
    %72 = arith.andi %69, %71 : vector<14x1xi1>
    %cst_24 = arith.constant 0.000000e+00 : f32
    %73 = vector.broadcast %cst_24 : f32 to vector<14x1xf32>
    %74 = arith.select %72, %18, %73 : vector<14x1xi1>, vector<14x1xf32>
    %75 = vector.shape_cast %74 : vector<14x1xf32> to vector<1x14x1xf32>
    %cst_25 = arith.constant dense<0.000000e+00> : vector<1xf32>
    %76 = vector.multi_reduction <add>, %75, %cst_25 [1, 2] : vector<1x14x1xf32> to vector<1xf32>
    %77 = vector.shape_cast %76 : vector<1xf32> to vector<1x1x1xf32>
    %78 = vector.extract %77[0, 0, 0] : f32 from vector<1x1x1xf32>
    %cst_26 = arith.constant 7.812500e-03 : f32
    %79 = arith.mulf %78, %cst_26 : f32
    %c0_27 = arith.constant 0 : index
    %c0_28 = arith.constant 0 : index
    %80 = vector.load %arg2[%c0_27, %c0_28] : memref<16x128xf32, #tpu.memory_space<vmem>>, vector<16x128xf32>
    %c0_29 = arith.constant 0 : index
    %c0_30 = arith.constant 0 : index
    %81 = vector.load %arg4[%c0_29, %c0_30] : memref<16x128xf32, #tpu.memory_space<vmem>>, vector<16x128xf32>
    %c1_i32 = arith.constant 1 : i32
    %82 = tpu.dynamic_rotate %80 by %c1_i32 dim 1 : vector<16x128xf32>, i32 -> vector<16x128xf32>
    %c127_i32 = arith.constant 127 : i32
    %83 = tpu.dynamic_rotate %80 by %c127_i32 dim 1 : vector<16x128xf32>, i32 -> vector<16x128xf32>
    %84 = arith.subf %82, %83 : vector<16x128xf32>
    %c1_i32_31 = arith.constant 1 : i32
    %85 = tpu.dynamic_rotate %80 by %c1_i32_31 dim 0 : vector<16x128xf32>, i32 -> vector<16x128xf32>
    %c15_i32 = arith.constant 15 : i32
    %86 = tpu.dynamic_rotate %80 by %c15_i32 dim 0 : vector<16x128xf32>, i32 -> vector<16x128xf32>
    %87 = arith.subf %85, %86 : vector<16x128xf32>
    %88 = arith.mulf %84, %84 : vector<16x128xf32>
    %89 = arith.mulf %87, %87 : vector<16x128xf32>
    %90 = arith.addf %88, %89 : vector<16x128xf32>
    %91 = math.sqrt %90 : vector<16x128xf32>
    %c1_i32_32 = arith.constant 1 : i32
    %92 = tpu.dynamic_rotate %81 by %c1_i32_32 dim 1 : vector<16x128xf32>, i32 -> vector<16x128xf32>
    %c127_i32_33 = arith.constant 127 : i32
    %93 = tpu.dynamic_rotate %81 by %c127_i32_33 dim 1 : vector<16x128xf32>, i32 -> vector<16x128xf32>
    %94 = arith.subf %92, %93 : vector<16x128xf32>
    %c1_i32_34 = arith.constant 1 : i32
    %95 = tpu.dynamic_rotate %81 by %c1_i32_34 dim 0 : vector<16x128xf32>, i32 -> vector<16x128xf32>
    %c15_i32_35 = arith.constant 15 : i32
    %96 = tpu.dynamic_rotate %81 by %c15_i32_35 dim 0 : vector<16x128xf32>, i32 -> vector<16x128xf32>
    %97 = arith.subf %95, %96 : vector<16x128xf32>
    %98 = arith.mulf %94, %94 : vector<16x128xf32>
    %99 = arith.mulf %97, %97 : vector<16x128xf32>
    %100 = arith.addf %98, %99 : vector<16x128xf32>
    %101 = math.sqrt %100 : vector<16x128xf32>
    %102 = arith.subf %91, %101 : vector<16x128xf32>
    %103 = math.absf %102 : vector<16x128xf32>
    %cst_36 = arith.constant 1.000000e+00 : f32
    %104 = vector.broadcast %cst_36 : f32 to vector<16x128xf32>
    %105 = arith.cmpf olt, %103, %104 : vector<16x128xf32>
    %cst_37 = arith.constant 5.000000e-01 : f32
    %106 = vector.broadcast %cst_37 : f32 to vector<16x128xf32>
    %107 = arith.mulf %106, %102 : vector<16x128xf32>
    %108 = arith.mulf %107, %102 : vector<16x128xf32>
    %cst_38 = arith.constant 5.000000e-01 : f32
    %109 = vector.broadcast %cst_38 : f32 to vector<16x128xf32>
    %110 = arith.subf %103, %109 : vector<16x128xf32>
    %111 = arith.select %105, %108, %110 : vector<16x128xi1>, vector<16x128xf32>
    %112 = tpu.iota {dimensions = array<i32: 0>} : vector<16x128xi32>
    %c1_i32_39 = arith.constant 1 : i32
    %113 = vector.broadcast %c1_i32_39 : i32 to vector<16x128xi32>
    %114 = arith.cmpi sge, %112, %113 : vector<16x128xi32>
    %c14_i32_40 = arith.constant 14 : i32
    %115 = vector.broadcast %c14_i32_40 : i32 to vector<16x128xi32>
    %116 = arith.cmpi sle, %112, %115 : vector<16x128xi32>
    %117 = arith.andi %114, %116 : vector<16x128xi1>
    %cst_41 = arith.constant 0.000000e+00 : f32
    %118 = vector.broadcast %cst_41 : f32 to vector<16x128xf32>
    %119 = arith.select %117, %111, %118 : vector<16x128xi1>, vector<16x128xf32>
    %cst_42 = arith.constant dense<0.000000e+00> : vector<128xf32>
    %120 = vector.multi_reduction <add>, %119, %cst_42 [0] : vector<16x128xf32> to vector<128xf32>
    %121 = vector.shape_cast %120 : vector<128xf32> to vector<1x128xf32>
    %122 = tpu.iota {dimensions = array<i32: 1>} : vector<1x128xi32>
    %c15_i32_43 = arith.constant 15 : i32
    %123 = vector.broadcast %c15_i32_43 : i32 to vector<1x128xi32>
    %124 = arith.andi %122, %123 : vector<1x128xi32>
    %c1_i32_44 = arith.constant 1 : i32
    %125 = vector.broadcast %c1_i32_44 : i32 to vector<1x128xi32>
    %126 = arith.cmpi sge, %124, %125 : vector<1x128xi32>
    %c14_i32_45 = arith.constant 14 : i32
    %127 = vector.broadcast %c14_i32_45 : i32 to vector<1x128xi32>
    %128 = arith.cmpi sle, %124, %127 : vector<1x128xi32>
    %129 = arith.andi %126, %128 : vector<1x128xi1>
    %c0_i32_46 = arith.constant 0 : i32
    %130 = vector.broadcast %c0_i32_46 : i32 to vector<1x128xi32>
    %131 = arith.cmpi sge, %122, %130 : vector<1x128xi32>
    %132 = arith.andi %129, %131 : vector<1x128xi1>
    %c32_i32 = arith.constant 32 : i32
    %133 = vector.broadcast %c32_i32 : i32 to vector<1x128xi32>
    %134 = arith.cmpi slt, %122, %133 : vector<1x128xi32>
    %135 = arith.andi %132, %134 : vector<1x128xi1>
    %cst_47 = arith.constant 0.000000e+00 : f32
    %136 = vector.broadcast %cst_47 : f32 to vector<1x128xf32>
    %137 = arith.select %135, %121, %136 : vector<1x128xi1>, vector<1x128xf32>
    %138 = vector.shape_cast %137 : vector<1x128xf32> to vector<1x1x128xf32>
    %cst_48 = arith.constant dense<0.000000e+00> : vector<1xf32>
    %139 = vector.multi_reduction <add>, %138, %cst_48 [1, 2] : vector<1x1x128xf32> to vector<1xf32>
    %140 = vector.shape_cast %139 : vector<1xf32> to vector<1x1x1xf32>
    %141 = vector.extract %140[0, 0, 0] : f32 from vector<1x1x1xf32>
    %cst_49 = arith.constant 0.00255102036 : f32
    %142 = arith.mulf %141, %cst_49 : f32
    %c32_i32_50 = arith.constant 32 : i32
    %143 = vector.broadcast %c32_i32_50 : i32 to vector<1x128xi32>
    %144 = arith.cmpi sge, %122, %143 : vector<1x128xi32>
    %145 = arith.andi %129, %144 : vector<1x128xi1>
    %c64_i32 = arith.constant 64 : i32
    %146 = vector.broadcast %c64_i32 : i32 to vector<1x128xi32>
    %147 = arith.cmpi slt, %122, %146 : vector<1x128xi32>
    %148 = arith.andi %145, %147 : vector<1x128xi1>
    %cst_51 = arith.constant 0.000000e+00 : f32
    %149 = vector.broadcast %cst_51 : f32 to vector<1x128xf32>
    %150 = arith.select %148, %121, %149 : vector<1x128xi1>, vector<1x128xf32>
    %151 = vector.shape_cast %150 : vector<1x128xf32> to vector<1x1x128xf32>
    %cst_52 = arith.constant dense<0.000000e+00> : vector<1xf32>
    %152 = vector.multi_reduction <add>, %151, %cst_52 [1, 2] : vector<1x1x128xf32> to vector<1xf32>
    %153 = vector.shape_cast %152 : vector<1xf32> to vector<1x1x1xf32>
    %154 = vector.extract %153[0, 0, 0] : f32 from vector<1x1x1xf32>
    %cst_53 = arith.constant 0.00255102036 : f32
    %155 = arith.mulf %154, %cst_53 : f32
    %c0_54 = arith.constant 0 : index
    %c0_55 = arith.constant 0 : index
    %156 = vector.load %arg3[%c0_54, %c0_55] : memref<8x128xf32, #tpu.memory_space<vmem>>, vector<8x128xf32>
    %c0_56 = arith.constant 0 : index
    %c0_57 = arith.constant 0 : index
    %157 = vector.load %arg5[%c0_56, %c0_57] : memref<8x128xf32, #tpu.memory_space<vmem>>, vector<8x128xf32>
    %c1_i32_58 = arith.constant 1 : i32
    %158 = tpu.dynamic_rotate %156 by %c1_i32_58 dim 1 : vector<8x128xf32>, i32 -> vector<8x128xf32>
    %c127_i32_59 = arith.constant 127 : i32
    %159 = tpu.dynamic_rotate %156 by %c127_i32_59 dim 1 : vector<8x128xf32>, i32 -> vector<8x128xf32>
    %160 = arith.subf %158, %159 : vector<8x128xf32>
    %c1_i32_60 = arith.constant 1 : i32
    %161 = tpu.dynamic_rotate %156 by %c1_i32_60 dim 0 : vector<8x128xf32>, i32 -> vector<8x128xf32>
    %c7_i32 = arith.constant 7 : i32
    %162 = tpu.dynamic_rotate %156 by %c7_i32 dim 0 : vector<8x128xf32>, i32 -> vector<8x128xf32>
    %163 = arith.subf %161, %162 : vector<8x128xf32>
    %164 = arith.mulf %160, %160 : vector<8x128xf32>
    %165 = arith.mulf %163, %163 : vector<8x128xf32>
    %166 = arith.addf %164, %165 : vector<8x128xf32>
    %167 = math.sqrt %166 : vector<8x128xf32>
    %c1_i32_61 = arith.constant 1 : i32
    %168 = tpu.dynamic_rotate %157 by %c1_i32_61 dim 1 : vector<8x128xf32>, i32 -> vector<8x128xf32>
    %c127_i32_62 = arith.constant 127 : i32
    %169 = tpu.dynamic_rotate %157 by %c127_i32_62 dim 1 : vector<8x128xf32>, i32 -> vector<8x128xf32>
    %170 = arith.subf %168, %169 : vector<8x128xf32>
    %c1_i32_63 = arith.constant 1 : i32
    %171 = tpu.dynamic_rotate %157 by %c1_i32_63 dim 0 : vector<8x128xf32>, i32 -> vector<8x128xf32>
    %c7_i32_64 = arith.constant 7 : i32
    %172 = tpu.dynamic_rotate %157 by %c7_i32_64 dim 0 : vector<8x128xf32>, i32 -> vector<8x128xf32>
    %173 = arith.subf %171, %172 : vector<8x128xf32>
    %174 = arith.mulf %170, %170 : vector<8x128xf32>
    %175 = arith.mulf %173, %173 : vector<8x128xf32>
    %176 = arith.addf %174, %175 : vector<8x128xf32>
    %177 = math.sqrt %176 : vector<8x128xf32>
    %178 = arith.subf %167, %177 : vector<8x128xf32>
    %179 = math.absf %178 : vector<8x128xf32>
    %cst_65 = arith.constant 1.000000e+00 : f32
    %180 = vector.broadcast %cst_65 : f32 to vector<8x128xf32>
    %181 = arith.cmpf olt, %179, %180 : vector<8x128xf32>
    %cst_66 = arith.constant 5.000000e-01 : f32
    %182 = vector.broadcast %cst_66 : f32 to vector<8x128xf32>
    %183 = arith.mulf %182, %178 : vector<8x128xf32>
    %184 = arith.mulf %183, %178 : vector<8x128xf32>
    %cst_67 = arith.constant 5.000000e-01 : f32
    %185 = vector.broadcast %cst_67 : f32 to vector<8x128xf32>
    %186 = arith.subf %179, %185 : vector<8x128xf32>
    %187 = arith.select %181, %184, %186 : vector<8x128xi1>, vector<8x128xf32>
    %188 = tpu.iota {dimensions = array<i32: 0>} : vector<8x128xi32>
    %c1_i32_68 = arith.constant 1 : i32
    %189 = vector.broadcast %c1_i32_68 : i32 to vector<8x128xi32>
    %190 = arith.cmpi sge, %188, %189 : vector<8x128xi32>
    %c6_i32 = arith.constant 6 : i32
    %191 = vector.broadcast %c6_i32 : i32 to vector<8x128xi32>
    %192 = arith.cmpi sle, %188, %191 : vector<8x128xi32>
    %193 = arith.andi %190, %192 : vector<8x128xi1>
    %cst_69 = arith.constant 0.000000e+00 : f32
    %194 = vector.broadcast %cst_69 : f32 to vector<8x128xf32>
    %195 = arith.select %193, %187, %194 : vector<8x128xi1>, vector<8x128xf32>
    %cst_70 = arith.constant dense<0.000000e+00> : vector<128xf32>
    %196 = vector.multi_reduction <add>, %195, %cst_70 [0] : vector<8x128xf32> to vector<128xf32>
    %197 = vector.shape_cast %196 : vector<128xf32> to vector<1x128xf32>
    %198 = tpu.iota {dimensions = array<i32: 1>} : vector<1x128xi32>
    %c7_i32_71 = arith.constant 7 : i32
    %199 = vector.broadcast %c7_i32_71 : i32 to vector<1x128xi32>
    %200 = arith.andi %198, %199 : vector<1x128xi32>
    %c1_i32_72 = arith.constant 1 : i32
    %201 = vector.broadcast %c1_i32_72 : i32 to vector<1x128xi32>
    %202 = arith.cmpi sge, %200, %201 : vector<1x128xi32>
    %c6_i32_73 = arith.constant 6 : i32
    %203 = vector.broadcast %c6_i32_73 : i32 to vector<1x128xi32>
    %204 = arith.cmpi sle, %200, %203 : vector<1x128xi32>
    %205 = arith.andi %202, %204 : vector<1x128xi1>
    %c0_i32_74 = arith.constant 0 : i32
    %206 = vector.broadcast %c0_i32_74 : i32 to vector<1x128xi32>
    %207 = arith.cmpi sge, %198, %206 : vector<1x128xi32>
    %208 = arith.andi %205, %207 : vector<1x128xi1>
    %c16_i32 = arith.constant 16 : i32
    %209 = vector.broadcast %c16_i32 : i32 to vector<1x128xi32>
    %210 = arith.cmpi slt, %198, %209 : vector<1x128xi32>
    %211 = arith.andi %208, %210 : vector<1x128xi1>
    %cst_75 = arith.constant 0.000000e+00 : f32
    %212 = vector.broadcast %cst_75 : f32 to vector<1x128xf32>
    %213 = arith.select %211, %197, %212 : vector<1x128xi1>, vector<1x128xf32>
    %214 = vector.shape_cast %213 : vector<1x128xf32> to vector<1x1x128xf32>
    %cst_76 = arith.constant dense<0.000000e+00> : vector<1xf32>
    %215 = vector.multi_reduction <add>, %214, %cst_76 [1, 2] : vector<1x1x128xf32> to vector<1xf32>
    %216 = vector.shape_cast %215 : vector<1xf32> to vector<1x1x1xf32>
    %217 = vector.extract %216[0, 0, 0] : f32 from vector<1x1x1xf32>
    %cst_77 = arith.constant 0.013888889 : f32
    %218 = arith.mulf %217, %cst_77 : f32
    %219 = arith.addf %31, %142 : f32
    %cst_78 = arith.constant 2.000000e+00 : f32
    %220 = arith.mulf %219, %cst_78 : f32
    %221 = arith.addf %43, %155 : f32
    %222 = arith.addf %55, %218 : f32
    %223 = arith.addf %220, %221 : f32
    %224 = arith.addf %223, %222 : f32
    %225 = arith.addf %224, %67 : f32
    %226 = arith.addf %225, %79 : f32
    %227 = tpu.iota {dimensions = array<i32: 1>} : vector<1x128xi32>
    %cst_79 = arith.constant 0.000000e+00 : f32
    %228 = vector.broadcast %cst_79 : f32 to vector<1x128xf32>
    %c0_i32_80 = arith.constant 0 : i32
    %229 = vector.broadcast %c0_i32_80 : i32 to vector<1x128xi32>
    %230 = arith.cmpi eq, %227, %229 : vector<1x128xi32>
    %231 = vector.broadcast %226 : f32 to vector<1x128xf32>
    %232 = arith.select %230, %231, %228 : vector<1x128xi1>, vector<1x128xf32>
    %c1_i32_81 = arith.constant 1 : i32
    %233 = vector.broadcast %c1_i32_81 : i32 to vector<1x128xi32>
    %234 = arith.cmpi eq, %227, %233 : vector<1x128xi32>
    %235 = vector.broadcast %220 : f32 to vector<1x128xf32>
    %236 = arith.select %234, %235, %232 : vector<1x128xi1>, vector<1x128xf32>
    %c2_i32 = arith.constant 2 : i32
    %237 = vector.broadcast %c2_i32 : i32 to vector<1x128xi32>
    %238 = arith.cmpi eq, %227, %237 : vector<1x128xi32>
    %239 = vector.broadcast %221 : f32 to vector<1x128xf32>
    %240 = arith.select %238, %239, %236 : vector<1x128xi1>, vector<1x128xf32>
    %c3_i32 = arith.constant 3 : i32
    %241 = vector.broadcast %c3_i32 : i32 to vector<1x128xi32>
    %242 = arith.cmpi eq, %227, %241 : vector<1x128xi32>
    %243 = vector.broadcast %222 : f32 to vector<1x128xf32>
    %244 = arith.select %242, %243, %240 : vector<1x128xi1>, vector<1x128xf32>
    %c4_i32_82 = arith.constant 4 : i32
    %245 = vector.broadcast %c4_i32_82 : i32 to vector<1x128xi32>
    %246 = arith.cmpi eq, %227, %245 : vector<1x128xi32>
    %247 = vector.broadcast %67 : f32 to vector<1x128xf32>
    %248 = arith.select %246, %247, %244 : vector<1x128xi1>, vector<1x128xf32>
    %c5_i32 = arith.constant 5 : i32
    %249 = vector.broadcast %c5_i32 : i32 to vector<1x128xi32>
    %250 = arith.cmpi eq, %227, %249 : vector<1x128xi32>
    %251 = vector.broadcast %79 : f32 to vector<1x128xf32>
    %252 = arith.select %250, %251, %248 : vector<1x128xi1>, vector<1x128xf32>
    %c0_83 = arith.constant 0 : index
    %c0_84 = arith.constant 0 : index
    %253 = vector.load %arg6[%c0_83, %c0_84] : memref<1x128xf32, #tpu.memory_space<vmem>>, vector<1x128xf32>
    tpu.vector_store %arg6[%c0_83, %c0_84], %252 {strides = array<i32>} : memref<1x128xf32, #tpu.memory_space<vmem>>, vector<1x128xf32>,
    return
  }
}

</mosaic_0001>

<llo_original>
// kernel: tpu_custom_call.1
$region0: #{tpu_custom_call.1}
  #allocation0 [shape = 'u32[]', space=smem, size = 0x4, offset = 0x4, fixed_abs, tag = 'smem constant byte address 0x4 - core index']
  #allocation1 [shape = 'u32[144,128]{1,0:T(1,128)}', space=vmem, size = 0x12000, scoped, tag = 'internal scratch']
  %s0 = inlined_call_operand.hbm [shape: f32[14,128], index: 0, kind: input, shape index: {}]
  %s1 = inlined_call_operand.hbm [shape: f32[14,128], index: 1, kind: input, shape index: {}]
  %s2 = inlined_call_operand.hbm [shape: f32[16,128], index: 2, kind: input, shape index: {}]
  %s3 = inlined_call_operand.hbm [shape: f32[8,128], index: 3, kind: input, shape index: {}]
  %s4 = inlined_call_operand.hbm [shape: f32[16,128], index: 4, kind: input, shape index: {}]
  %s5 = inlined_call_operand.vmem [shape: f32[8,128], index: 5, kind: input, shape index: {}]
  %s6 = inlined_call_operand.hbm [shape: f32[1,128], index: 6, kind: output, shape index: {}]
  %s7 = sld [smem:[#allocation0]]
  $region54: #{tpu_custom_call.1} parent=0
    _
  %s9 = ssub.s32 1, %s7
  %s10 = scalar_select 0, %s9, %s7
  $region1: #{tpu_custom_call.1} parent=0
    #allocation2 [shape = 'u8[8192]{0}', space=vmem, size = 0x2000, scoped, tag = 'input window, operand 0, single buffered']
    #allocation3 [shape = 's32[1]{0}', space=sflag, size = 0x4, scoped, tag = 'scoped memory for tpu_custom_call.1']
    #allocation4 [shape = 's32[1]{0}', space=sflag, size = 0x4, scoped, tag = 'scoped memory for tpu_custom_call.1']
    #allocation5 [shape = 'u8[8192]{0}', space=vmem, size = 0x2000, scoped, tag = 'input window, operand 1, single buffered']
    #allocation6 [shape = 's32[1]{0}', space=sflag, size = 0x4, scoped, tag = 'scoped memory for tpu_custom_call.1']
    #allocation7 [shape = 'u8[8192]{0}', space=vmem, size = 0x2000, scoped, tag = 'input window, operand 2, single buffered']
    #allocation8 [shape = 'u8[4096]{0}', space=vmem, size = 0x1000, scoped, tag = 'input window, operand 3, single buffered']
    #allocation9 [shape = 's32[1]{0}', space=sflag, size = 0x4, scoped, tag = 'scoped memory for tpu_custom_call.1']
    #allocation10 [shape = 'u8[8192]{0}', space=vmem, size = 0x2000, scoped, tag = 'input window, operand 4, single buffered']
    #allocation11 [shape = 'u8[512]{0}', space=vmem, size = 0x400, scoped, tag = 'output window, operand 0, single buffered']
    %11 = vsyncpa [#allocation3], 0
    %12 = vsyncpa [#allocation6], 0
    %13 = vsyncpa [#allocation9], 0
    %14 = vsyncpa [#allocation4], 0
    // Predicated region
    $region2: #{tpu_custom_call.1} parent=1 // pred_check
      _
    $region3: #{tpu_custom_call.1} parent=1 // pred_check_branch
      %16 = sbr.rel (0) target = $region5
    $region4: #{tpu_custom_call.1} parent=1 // pred_region
      %s18 = ssub.s32 256, 256
      %19 = vsyncadd [#allocation3], %s18
      %s20 = sshll.u32 [#allocation2], 4
      %s21 = int_to_ptr.vmem [resolvable:$true] %s20
      %26 = dma.hbm_to_vmem [thread:$0]  %s0, 256, %s21, [#allocation3], 128, 128, 8
    $region5: #{tpu_custom_call.1} parent=1 // pred_fallthru
      _
    // Predicated region
    $region6: #{tpu_custom_call.1} parent=1 // pred_check
      _
    $region7: #{tpu_custom_call.1} parent=1 // pred_check_branch
      %28 = sbr.rel (0) target = $region9
    $region8: #{tpu_custom_call.1} parent=1 // pred_region
      %s30 = ssub.s32 256, 256
      %31 = vsyncadd [#allocation6], %s30
      %s32 = sshll.u32 [#allocation5], 4
      %s33 = int_to_ptr.vmem [resolvable:$true] %s32
      %38 = dma.hbm_to_vmem [thread:$0]  %s1, 256, %s33, [#allocation6], 128, 128, 8
    $region9: #{tpu_custom_call.1} parent=1 // pred_fallthru
      _
    // Predicated region
    $region10: #{tpu_custom_call.1} parent=1 // pred_check
      _
    $region11: #{tpu_custom_call.1} parent=1 // pred_check_branch
      %40 = sbr.rel (0) target = $region13
    $region12: #{tpu_custom_call.1} parent=1 // pred_region
      %s42 = ssub.s32 256, 256
      %43 = vsyncadd [#allocation6], %s42
      %s44 = sshll.u32 [#allocation7], 4
      %s45 = int_to_ptr.vmem [resolvable:$true] %s44
      %50 = dma.hbm_to_vmem [thread:$0]  %s2, 256, %s45, [#allocation6], 128, 128, 8
    $region13: #{tpu_custom_call.1} parent=1 // pred_fallthru
      _
    // Predicated region
    $region14: #{tpu_custom_call.1} parent=1 // pred_check
      _
    $region15: #{tpu_custom_call.1} parent=1 // pred_check_branch
      %52 = sbr.rel (0) target = $region17
    $region16: #{tpu_custom_call.1} parent=1 // pred_region
      %s54 = ssub.s32 128, 128
      %55 = vsyncadd [#allocation9], %s54
      %s57 = sshll.u32 [#allocation8], 4
      %s58 = int_to_ptr.vmem [resolvable:$true] %s57
      %60 = dma.hbm_to_vmem [thread:$0]  %s3, 128, %s58, [#allocation9]
    $region17: #{tpu_custom_call.1} parent=1 // pred_fallthru
      _
    // Predicated region
    $region18: #{tpu_custom_call.1} parent=1 // pred_check
      _
    $region19: #{tpu_custom_call.1} parent=1 // pred_check_branch
      %62 = sbr.rel (0) target = $region21
    $region20: #{tpu_custom_call.1} parent=1 // pred_region
      %s64 = ssub.s32 256, 256
      %65 = vsyncadd [#allocation9], %s64
      %s66 = sshll.u32 [#allocation10], 4
      %s67 = int_to_ptr.vmem [resolvable:$true] %s66
      %72 = dma.hbm_to_vmem [thread:$0]  %s4, 256, %s67, [#allocation9], 128, 128, 8
    $region21: #{tpu_custom_call.1} parent=1 // pred_fallthru
      _
    // Predicated region
    $region22: #{tpu_custom_call.1} parent=1 // pred_check
      _
    $region23: #{tpu_custom_call.1} parent=1 // pred_check_branch
      %74 = sbr.rel (0) target = $region25
    $region24: #{tpu_custom_call.1} parent=1 // pred_region
      _
    $region25: #{tpu_custom_call.1} parent=1 // pred_fallthru
      _
    // Predicated region
    $region26: #{tpu_custom_call.1} parent=1 // pred_check
      _
    $region27: #{tpu_custom_call.1} parent=1 // pred_check_branch
      %76 = sbr.rel (0) target = $region29
    $region28: #{tpu_custom_call.1} parent=1 // pred_region
      %77 = dma.done [#allocation3], 256
    $region29: #{tpu_custom_call.1} parent=1 // pred_fallthru
      _
    // Predicated region
    $region30: #{tpu_custom_call.1} parent=1 // pred_check
      _
    $region31: #{tpu_custom_call.1} parent=1 // pred_check_branch
      %79 = sbr.rel (0) target = $region33
    $region32: #{tpu_custom_call.1} parent=1 // pred_region
      %80 = dma.done [#allocation6], 256
    $region33: #{tpu_custom_call.1} parent=1 // pred_fallthru
      _
    // Predicated region
    $region34: #{tpu_custom_call.1} parent=1 // pred_check
      _
    $region35: #{tpu_custom_call.1} parent=1 // pred_check_branch
      %82 = sbr.rel (0) target = $region37
    $region36: #{tpu_custom_call.1} parent=1 // pred_region
      %83 = dma.done [#allocation6], 256
    $region37: #{tpu_custom_call.1} parent=1 // pred_fallthru
      _
    // Predicated region
    $region38: #{tpu_custom_call.1} parent=1 // pred_check
      _
    $region39: #{tpu_custom_call.1} parent=1 // pred_check_branch
      %85 = sbr.rel (0) target = $region41
    $region40: #{tpu_custom_call.1} parent=1 // pred_region
      %86 = dma.done [#allocation9], 128
    $region41: #{tpu_custom_call.1} parent=1 // pred_fallthru
      _
    // Predicated region
    $region42: #{tpu_custom_call.1} parent=1 // pred_check
      _
    $region43: #{tpu_custom_call.1} parent=1 // pred_check_branch
      %88 = sbr.rel (0) target = $region45
    $region44: #{tpu_custom_call.1} parent=1 // pred_region
      %89 = dma.done [#allocation9], 256
    $region45: #{tpu_custom_call.1} parent=1 // pred_fallthru
      _
    %v90 = vld [vmem:[#allocation2] sm:$0xff]
    %v91 = vld [vmem:[#allocation2 + $0x8] sm:$0x3f]
    %v92 = vld [vmem:[#allocation5] sm:$0xff]
    %v93 = vld [vmem:[#allocation5 + $0x8] sm:$0x3f]
    %v94 = vlog2.pop %v90
    %v95 = vmul.f32 %v94, 0.6931472
    %v96 = vlog2.pop %v91
    %v97 = vmul.f32 %v96, 0.6931472
    %v98 = vmax.f32 %v95, -100.0
    %v99 = vmax.f32 %v97, -100.0
    %v100 = vsub.f32 1.0, %v90
    %v101 = vsub.f32 1.0, %v91
    %v102 = vlog2.pop %v100
    %v103 = vmul.f32 %v102, 0.6931472
    %v104 = vlog2.pop %v101
    %v105 = vmul.f32 %v104, 0.6931472
    %v106 = vmax.f32 %v103, -100.0
    %v107 = vmax.f32 %v105, -100.0
    %v108 = vmul.f32 %v92, %v98
    %v109 = vmul.f32 %v93, %v99
    %v110 = vsub.f32 1.0, %v92
    %v111 = vsub.f32 1.0, %v93
    %v112 = vmul.f32 %v110, %v106
    %v113 = vmul.f32 %v111, %v107
    %v114 = vadd.f32 %v108, %v112
    %v115 = vadd.f32 %v109, %v113
    %v116 = vsub.f32 0.0, %v114
    %v117 = vsub.f32 0.0, %v115
    %118 = vadd.xlane.f32.xlu0 %v116
    %v119 = vpop.xlane.xlu0 %118
    %vm120 = vcmask 1045504
    %v121 = vsel %vm120, %v117, 0.0
    %122 = vadd.xlane.f32.xlu0 %v121
    %v123 = vpop.xlane.xlu0 %122
    %v124 = vlaneseq
    %v125 = vshrl.u32 %v124, 7
    %v126 = vadd.s32 %v125, 8
    %vm127 = vcmp.ge.s32.totalorder %v125, 0
    %vm128 = vcmp.ge.s32.totalorder %v126, 0
    %vm129 = vcmp.lt.s32.totalorder %v125, 4
    %vm130 = vcmp.lt.s32.totalorder %v126, 4
    %vm131 = vmand %vm127, %vm129
    %vm132 = vmand %vm128, %vm130
    %v133 = vsel %vm131, %v119, 0.0
    %v134 = vsel %vm132, %v123, 0.0
    %vm135 = vcmask 7168
    %v136 = vsel %vm135, %v133, 0.0
    %vm137 = vcmask 5120
    %v138 = vsel %vm137, %v134, 0.0
    %v139 = vadd.f32 %v136, %v138
    %140 = vadd.xlane.f32.xlu0 %v139
    %v141 = vpop.xlane.xlu0 %140
    %v142 = vrot.slane %v141, 4
    %v143 = vadd.f32 %v141, %v142
    %v144 = vrot.slane %v143, 2
    %v145 = vadd.f32 %v143, %v144
    %v146 = vrot.slane %v145, 1
    %v147 = vadd.f32 %v145, %v146
    %s148 = vtos %v147
    %s149 = smul.f32 %s148, 0.001953125
    %vm150 = vcmp.ge.s32.totalorder %v125, 4
    %vm151 = vcmp.ge.s32.totalorder %v126, 4
    %vm152 = vcmp.lt.s32.totalorder %v125, 8
    %vm153 = vcmp.lt.s32.totalorder %v126, 8
    %vm154 = vmand %vm150, %vm152
    %vm155 = vmand %vm151, %vm153
    %v156 = vsel %vm154, %v119, 0.0
    %v157 = vsel %vm155, %v123, 0.0
    %v158 = vsel %vm135, %v156, 0.0
    %v159 = vsel %vm137, %v157, 0.0
    %v160 = vadd.f32 %v158, %v159
    %161 = vadd.xlane.f32.xlu0 %v160
    %v162 = vpop.xlane.xlu0 %161
    %v163 = vrot.slane %v162, 4
    %v164 = vadd.f32 %v162, %v163
    %v165 = vrot.slane %v164, 2
    %v166 = vadd.f32 %v164, %v165
    %v167 = vrot.slane %v166, 1
    %v168 = vadd.f32 %v166, %v167
    %s169 = vtos %v168
    %s170 = smul.f32 %s169, 0.001953125
    %vm171 = vcmp.ge.s32.totalorder %v125, 8
    %vm172 = vcmp.ge.s32.totalorder %v126, 8
    %vm173 = vcmp.lt.s32.totalorder %v125, 9
    %vm174 = vcmp.lt.s32.totalorder %v126, 9
    %vm175 = vmand %vm171, %vm173
    %vm176 = vmand %vm172, %vm174
    %v177 = vsel %vm175, %v119, 0.0
    %v178 = vsel %vm176, %v123, 0.0
    %v179 = vsel %vm135, %v177, 0.0
    %v180 = vsel %vm137, %v178, 0.0
    %v181 = vadd.f32 %v179, %v180
    %182 = vadd.xlane.f32.xlu0 %v181
    %v183 = vpop.xlane.xlu0 %182
    %v184 = vrot.slane %v183, 4
    %v185 = vadd.f32 %v183, %v184
    %v186 = vrot.slane %v185, 2
    %v187 = vadd.f32 %v185, %v186
    %v188 = vrot.slane %v187, 1
    %v189 = vadd.f32 %v187, %v188
    %s190 = vtos %v189
    %s191 = smul.f32 %s190, 0.0078125
    %vm192 = vcmp.ge.s32.totalorder %v125, 9
    %vm193 = vcmp.ge.s32.totalorder %v126, 9
    %vm194 = vcmp.lt.s32.totalorder %v125, 13
    %vm195 = vcmp.lt.s32.totalorder %v126, 13
    %vm196 = vmand %vm192, %vm194
    %vm197 = vmand %vm193, %vm195
    %v198 = vsel %vm196, %v119, 0.0
    %v199 = vsel %vm197, %v123, 0.0
    %v200 = vsel %vm135, %v198, 0.0
    %v201 = vsel %vm137, %v199, 0.0
    %v202 = vadd.f32 %v200, %v201
    %203 = vadd.xlane.f32.xlu0 %v202
    %v204 = vpop.xlane.xlu0 %203
    %v205 = vrot.slane %v204, 4
    %v206 = vadd.f32 %v204, %v205
    %v207 = vrot.slane %v206, 2
    %v208 = vadd.f32 %v206, %v207
    %v209 = vrot.slane %v208, 1
    %v210 = vadd.f32 %v208, %v209
    %s211 = vtos %v210
    %s212 = smul.f32 %s211, 0.001953125
    %vm213 = vcmp.ge.s32.totalorder %v125, 13
    %vm214 = vcmp.ge.s32.totalorder %v126, 13
    %vm215 = vcmp.lt.s32.totalorder %v125, 14
    %vm216 = vcmp.lt.s32.totalorder %v126, 14
    %vm217 = vmand %vm213, %vm215
    %vm218 = vmand %vm214, %vm216
    %v219 = vsel %vm217, %v119, 0.0
    %v220 = vsel %vm218, %v123, 0.0
    %v221 = vsel %vm135, %v219, 0.0
    %v222 = vsel %vm137, %v220, 0.0
    %v223 = vadd.f32 %v221, %v222
    %224 = vadd.xlane.f32.xlu0 %v223
    %v225 = vpop.xlane.xlu0 %224
    %v226 = vrot.slane %v225, 4
    %v227 = vadd.f32 %v225, %v226
    %v228 = vrot.slane %v227, 2
    %v229 = vadd.f32 %v227, %v228
    %v230 = vrot.slane %v229, 1
    %v231 = vadd.f32 %v229, %v230
    %s232 = vtos %v231
    %s233 = smul.f32 %s232, 0.0078125
    %v234 = vld [vmem:[#allocation7] sm:$0xff]
    %v235 = vld [vmem:[#allocation7 + $0x8] sm:$0xff]
    %v236 = vld [vmem:[#allocation10] sm:$0xff]
    %v237 = vld [vmem:[#allocation10 + $0x8] sm:$0xff]
    %238 = vrot.lane.b32.xlu0 %v234, 1
    %v239 = vpop.permute.xlu0 %238
    %240 = vrot.lane.b32.xlu0 %v235, 1
    %v241 = vpop.permute.xlu0 %240
    %242 = vrot.lane.b32.xlu0 %v234, 127
    %v243 = vpop.permute.xlu0 %242
    %244 = vrot.lane.b32.xlu0 %v235, 127
    %v245 = vpop.permute.xlu0 %244
    %v246 = vsub.f32 %v239, %v243
    %v247 = vsub.f32 %v241, %v245
    %v248 = vrot.slane %v234, 7
    %v249 = vrot.slane %v235, 7
    %vm250 = vcmp.lt.s32.totalorder %v125, 1
    %v251 = vsel %vm250, %v248, %v249
    %v252 = vsel %vm250, %v249, %v248
    %v253 = vrot.slane %v234, 1
    %v254 = vrot.slane %v235, 1
    %vm255 = vcmp.lt.s32.totalorder %v125, 7
    %v256 = vsel %vm255, %v253, %v254
    %v257 = vsel %vm255, %v254, %v253
    %v258 = vsub.f32 %v252, %v256
    %v259 = vsub.f32 %v251, %v257
    %v260 = vmul.f32 %v246, %v246
    %v261 = vmul.f32 %v247, %v247
    %v262 = vmul.f32 %v258, %v258
    %v263 = vmul.f32 %v259, %v259
    %v264 = vadd.f32 %v260, %v262
    %v265 = vadd.f32 %v261, %v263
    %v266 = vrsqrt.pop %v264
    %v267 = vmul.f32 %v264, %v266
    %vm268 = vcmp.eq.f32.partialorder %v264, inf
    %v269 = vsel %vm268, %v264, %v267
    %vm270 = vcmp.eq.f32.partialorder %v264, 0.0
    %v271 = vand.u32 %v264, 2147483648
    %v272 = vsel %vm270, %v271, %v269
    %v273 = vrsqrt.pop %v265
    %v274 = vmul.f32 %v265, %v273
    %vm275 = vcmp.eq.f32.partialorder %v265, inf
    %v276 = vsel %vm275, %v265, %v274
    %vm277 = vcmp.eq.f32.partialorder %v265, 0.0
    %v278 = vand.u32 %v265, 2147483648
    %v279 = vsel %vm277, %v278, %v276
    %280 = vrot.lane.b32.xlu0 %v236, 1
    %v281 = vpop.permute.xlu0 %280
    %282 = vrot.lane.b32.xlu0 %v237, 1
    %v283 = vpop.permute.xlu0 %282
    %284 = vrot.lane.b32.xlu0 %v236, 127
    %v285 = vpop.permute.xlu0 %284
    %286 = vrot.lane.b32.xlu0 %v237, 127
    %v287 = vpop.permute.xlu0 %286
    %v288 = vsub.f32 %v281, %v285
    %v289 = vsub.f32 %v283, %v287
    %v290 = vrot.slane %v236, 7
    %v291 = vrot.slane %v237, 7
    %v292 = vsel %vm250, %v290, %v291
    %v293 = vsel %vm250, %v291, %v290
    %v294 = vrot.slane %v236, 1
    %v295 = vrot.slane %v237, 1
    %v296 = vsel %vm255, %v294, %v295
    %v297 = vsel %vm255, %v295, %v294
    %v298 = vsub.f32 %v293, %v296
    %v299 = vsub.f32 %v292, %v297
    %v300 = vmul.f32 %v288, %v288
    %v301 = vmul.f32 %v289, %v289
    %v302 = vmul.f32 %v298, %v298
    %v303 = vmul.f32 %v299, %v299
    %v304 = vadd.f32 %v300, %v302
    %v305 = vadd.f32 %v301, %v303
    %v306 = vrsqrt.pop %v304
    %v307 = vmul.f32 %v304, %v306
    %vm308 = vcmp.eq.f32.partialorder %v304, inf
    %v309 = vsel %vm308, %v304, %v307
    %vm310 = vcmp.eq.f32.partialorder %v304, 0.0
    %v311 = vand.u32 %v304, 2147483648
    %v312 = vsel %vm310, %v311, %v309
    %v313 = vrsqrt.pop %v305
    %v314 = vmul.f32 %v305, %v313
    %vm315 = vcmp.eq.f32.partialorder %v305, inf
    %v316 = vsel %vm315, %v305, %v314
    %vm317 = vcmp.eq.f32.partialorder %v305, 0.0
    %v318 = vand.u32 %v305, 2147483648
    %v319 = vsel %vm317, %v318, %v316
    %v320 = vsub.f32 %v272, %v312
    %v321 = vsub.f32 %v279, %v319
    %v322 = vand.u32 2147483647, %v320
    %v323 = vand.u32 2147483647, %v321
    %vm324 = vcmp.lt.f32.partialorder %v322, 1.0
    %vm325 = vcmp.lt.f32.partialorder %v323, 1.0
    %v326 = vmul.f32 %v320, 0.5
    %v327 = vmul.f32 %v321, 0.5
    %v328 = vmul.f32 %v326, %v320
    %v329 = vmul.f32 %v327, %v321
    %v330 = vsub.f32 %v322, 0.5
    %v331 = vsub.f32 %v323, 0.5
    %v332 = vsel %vm324, %v328, %v330
    %v333 = vsel %vm325, %v329, %v331
    %vm334 = vcmp.ge.s32.totalorder %v125, 1
    %vm335 = vcmp.ge.s32.totalorder %v126, 1
    %vm336 = vcmp.le.s32.totalorder %v125, 14
    %vm337 = vcmp.le.s32.totalorder %v126, 14
    %vm338 = vmand %vm334, %vm336
    %vm339 = vmand %vm335, %vm337
    %v340 = vsel %vm338, %v332, 0.0
    %v341 = vsel %vm339, %v333, 0.0
    %v342 = vadd.f32 %v340, %v341
    %v343 = vrot.slane %v342, 4
    %v344 = vadd.f32 %v342, %v343
    %v345 = vrot.slane %v344, 2
    %v346 = vadd.f32 %v344, %v345
    %v347 = vrot.slane %v346, 1
    %v348 = vadd.f32 %v346, %v347
    %v349 = vlaneseq
    %v350 = vand.u32 %v349, 127
    %v351 = vand.u32 %v350, 15
    %vm352 = vcmp.ge.s32.totalorder %v351, 1
    %vm353 = vcmp.le.s32.totalorder %v351, 14
    %vm354 = vmand %vm352, %vm353
    %vm355 = vcmp.ge.s32.totalorder %v350, 0
    %vm356 = vmand %vm354, %vm355
    %vm357 = vcmp.lt.s32.totalorder %v350, 32
    %vm358 = vmand %vm356, %vm357
    %v359 = vsel %vm358, %v348, 0.0
    %vm360 = vcmask 1040384
    %v361 = vsel %vm360, %v359, 0.0
    %362 = vadd.xlane.f32.xlu0 %v361
    %v363 = vpop.xlane.xlu0 %362
    %v364 = vrot.slane %v363, 4
    %v365 = vadd.f32 %v363, %v364
    %v366 = vrot.slane %v365, 2
    %v367 = vadd.f32 %v365, %v366
    %v368 = vrot.slane %v367, 1
    %v369 = vadd.f32 %v367, %v368
    %s370 = vtos %v369
    %s371 = smul.f32 %s370, 0.0025510204
    %vm372 = vcmp.ge.s32.totalorder %v350, 32
    %vm373 = vmand %vm354, %vm372
    %vm374 = vcmp.lt.s32.totalorder %v350, 64
    %vm375 = vmand %vm373, %vm374
    %v376 = vsel %vm375, %v348, 0.0
    %v377 = vsel %vm360, %v376, 0.0
    %378 = vadd.xlane.f32.xlu0 %v377
    %v379 = vpop.xlane.xlu0 %378
    %v380 = vrot.slane %v379, 4
    %v381 = vadd.f32 %v379, %v380
    %v382 = vrot.slane %v381, 2
    %v383 = vadd.f32 %v381, %v382
    %v384 = vrot.slane %v383, 1
    %v385 = vadd.f32 %v383, %v384
    %s386 = vtos %v385
    %s387 = smul.f32 %s386, 0.0025510204
    %v388 = vld [vmem:[#allocation8] sm:$0xff]
    %v389 = vld [vmem:[%s5] sm:$0xff]
    %390 = vrot.lane.b32.xlu0 %v388, 1
    %v391 = vpop.permute.xlu0 %390
    %392 = vrot.lane.b32.xlu0 %v388, 127
    %v393 = vpop.permute.xlu0 %392
    %v394 = vsub.f32 %v391, %v393
    %v395 = vrot.slane %v388, 7
    %v396 = vrot.slane %v388, 1
    %v397 = vsub.f32 %v395, %v396
    %v398 = vmul.f32 %v394, %v394
    %v399 = vmul.f32 %v397, %v397
    %v400 = vadd.f32 %v398, %v399
    %v401 = vrsqrt.pop %v400
    %v402 = vmul.f32 %v400, %v401
    %vm403 = vcmp.eq.f32.partialorder %v400, inf
    %v404 = vsel %vm403, %v400, %v402
    %vm405 = vcmp.eq.f32.partialorder %v400, 0.0
    %v406 = vand.u32 %v400, 2147483648
    %v407 = vsel %vm405, %v406, %v404
    %408 = vrot.lane.b32.xlu0 %v389, 1
    %v409 = vpop.permute.xlu0 %408
    %410 = vrot.lane.b32.xlu0 %v389, 127
    %v411 = vpop.permute.xlu0 %410
    %v412 = vsub.f32 %v409, %v411
    %v413 = vrot.slane %v389, 7
    %v414 = vrot.slane %v389, 1
    %v415 = vsub.f32 %v413, %v414
    %v416 = vmul.f32 %v412, %v412
    %v417 = vmul.f32 %v415, %v415
    %v418 = vadd.f32 %v416, %v417
    %v419 = vrsqrt.pop %v418
    %v420 = vmul.f32 %v418, %v419
    %vm421 = vcmp.eq.f32.partialorder %v418, inf
    %v422 = vsel %vm421, %v418, %v420
    %vm423 = vcmp.eq.f32.partialorder %v418, 0.0
    %v424 = vand.u32 %v418, 2147483648
    %v425 = vsel %vm423, %v424, %v422
    %v426 = vsub.f32 %v407, %v425
    %v427 = vand.u32 2147483647, %v426
    %vm428 = vcmp.lt.f32.partialorder %v427, 1.0
    %v429 = vmul.f32 %v426, 0.5
    %v430 = vmul.f32 %v429, %v426
    %v431 = vsub.f32 %v427, 0.5
    %v432 = vsel %vm428, %v430, %v431
    %vm433 = vcmp.le.s32.totalorder %v125, 6
    %vm434 = vmand %vm334, %vm433
    %v435 = vsel %vm434, %v432, 0.0
    %v436 = vrot.slane %v435, 4
    %v437 = vadd.f32 %v435, %v436
    %v438 = vrot.slane %v437, 2
    %v439 = vadd.f32 %v437, %v438
    %v440 = vrot.slane %v439, 1
    %v441 = vadd.f32 %v439, %v440
    %v442 = vand.u32 %v350, 7
    %vm443 = vcmp.ge.s32.totalorder %v442, 1
    %vm444 = vcmp.le.s32.totalorder %v442, 6
    %vm445 = vmand %vm443, %vm444
    %vm446 = vmand %vm445, %vm355
    %vm447 = vcmp.lt.s32.totalorder %v350, 16
    %vm448 = vmand %vm446, %vm447
    %v449 = vsel %vm448, %v441, 0.0
    %v450 = vsel %vm360, %v449, 0.0
    %451 = vadd.xlane.f32.xlu0 %v450
    %v452 = vpop.xlane.xlu0 %451
    %v453 = vrot.slane %v452, 4
    %v454 = vadd.f32 %v452, %v453
    %v455 = vrot.slane %v454, 2
    %v456 = vadd.f32 %v454, %v455
    %v457 = vrot.slane %v456, 1
    %v458 = vadd.f32 %v456, %v457
    %s459 = vtos %v458
    %s460 = smul.f32 %s459, 0.013888889
    %s461 = sadd.f32 %s149, %s371
    %s462 = smul.f32 %s461, 2.0
    %s463 = sadd.f32 %s170, %s387
    %s464 = sadd.f32 %s191, %s460
    %s465 = sadd.f32 %s462, %s463
    %s466 = sadd.f32 %s465, %s464
    %s467 = sadd.f32 %s466, %s212
    %s468 = sadd.f32 %s467, %s233
    %vm469 = vcmp.eq.s32.totalorder %v350, 0
    %v470 = vstv %s468
    %v471 = vsel %vm469, %v470, 0.0
    %vm472 = vcmp.eq.s32.totalorder %v350, 1
    %v473 = vstv %s462
    %v474 = vsel %vm472, %v473, %v471
    %vm475 = vcmp.eq.s32.totalorder %v350, 2
    %v476 = vstv %s463
    %v477 = vsel %vm475, %v476, %v474
    %vm478 = vcmp.eq.s32.totalorder %v350, 3
    %v479 = vstv %s464
    %v480 = vsel %vm478, %v479, %v477
    %vm481 = vcmp.eq.s32.totalorder %v350, 4
    %v482 = vstv %s212
    %v483 = vsel %vm481, %v482, %v480
    %vm484 = vcmp.eq.s32.totalorder %v350, 5
    %v485 = vstv %s233
    %v486 = vsel %vm484, %v485, %v483
    %487 = vst [vmem:[#allocation11] sm:$0x1] %v486
    // Predicated region
    $region46: #{tpu_custom_call.1} parent=1 // pred_check
      _
    $region47: #{tpu_custom_call.1} parent=1 // pred_check_branch
      %489 = sbr.rel (0) target = $region49
    $region48: #{tpu_custom_call.1} parent=1 // pred_region
      %s491 = ssub.s32 16, 16
      %492 = vsyncadd [#allocation4], %s491
      %s494 = sshll.u32 [#allocation11], 4
      %s495 = int_to_ptr.vmem [resolvable:$true] %s494
      %497 = dma.vmem_to_hbm [thread:$0]  %s495, 16, %s6, [#allocation4]
    $region49: #{tpu_custom_call.1} parent=1 // pred_fallthru
      _
    // Predicated region
    $region50: #{tpu_custom_call.1} parent=1 // pred_check
      _
    $region51: #{tpu_custom_call.1} parent=1 // pred_check_branch
      %499 = sbr.rel (0) target = $region53
    $region52: #{tpu_custom_call.1} parent=1 // pred_region
      %500 = dma.done [#allocation4], 16
    $region53: #{tpu_custom_call.1} parent=1 // pred_fallthru
      _
    %501 = vsyncpa [#allocation3], 1
    %502 = vsyncpa [#allocation6], 1
    %503 = vsyncpa [#allocation9], 1
    %504 = vsyncpa [#allocation4], 1

</llo_original>
